<compile_context>
chip_gen: v6e
topology: v6e:2x2x1
jax: 0.10.0
libtpu: 0.0.40
codegen_flags: <defaults>
</compile_context>

<pallas_src>
import functools
import inspect

import jax
import jax.numpy as jnp
from jax import lax
from jax.experimental import pallas as pl
from jax.experimental.pallas import tpu as pltpu

EPS = 1e-6  # RMSNorm eps


def _round_up(n, m):
    return ((n + m - 1) // m) * m


def _cdiv(a, b):
    return -(-a // b)


def _pad_to(a, shape):
    pads = [(0, t - s) for s, t in zip(a.shape, shape)]
    if all(p == (0, 0) for p in pads):
        return a
    return jnp.pad(a, pads)


def _vmem_capacity_bytes():
    """Best-effort per-core VMEM capacity query; safe conservative default otherwise."""
    if hasattr(pltpu, "get_tpu_info"):
        try:
            cap = getattr(pltpu.get_tpu_info(), "vmem_capacity_bytes", None)
            if cap:
                return int(cap)
        except Exception:  # best-effort probe only; default below is always safe
            pass
    return 64 << 20  # v7x per-TensorCore VMEM (smallest current part)


def _supports_pipeline_mode():
    """Explicit feature detection for BlockSpec(pipeline_mode=...)."""
    if not hasattr(pl, "Buffered"):
        return False
    try:
        return "pipeline_mode" in inspect.signature(pl.BlockSpec).parameters
    except (TypeError, ValueError):
        return False


def _elu(y):
    # ELU(alpha=1) in f32: exp lowers to the EUP (its own VLIW slot) + one VPU select.
    return jnp.where(y > 0, y, jnp.exp(jnp.minimum(y, 0.0)) - 1.0)


def snn_fusion_kernel(x1_ref, x2_ref,
                      g1_ref, w1_ref, b1_ref,
                      g2_ref, w2_ref, b2_ref,
                      o_ref, *, d_true, n2_true):
    """One batch-block: x1_ref (TB, N1p, Dp), x2_ref (TB, N2p, Dp), o_ref (TB, N1p, Dp)."""
    TB, N1p, Dp = x1_ref.shape
    _, N2p, _ = x2_ref.shape
    f32 = jnp.float32
    inv_d = 1.0 / float(d_true)
    inv_n2 = 1.0 / float(n2_true)

    # ---- branch 1: snn1(norm1(x1)) -----------------------------------------
    # Activations arrive bf16; RMSNorm statistics / scaling run in f32, MXU operands are
    # bf16 with an f32 accumulator (v5e VPU/EUP lack bf16, so keep elementwise math f32).
    x1 = x1_ref[...].astype(f32)
    ms1 = jnp.sum(x1 * x1, axis=-1, keepdims=True) * inv_d        # sum / true-D (pad lanes are 0)
    h1 = x1 * lax.rsqrt(ms1 + EPS) * g1_ref[...].astype(f32)      # (TB, N1p, Dp) f32
    h1 = h1.astype(w1_ref.dtype).reshape(TB * N1p, Dp)            # bf16 MXU operands, M = TB*N1p
    y1 = jnp.dot(h1, w1_ref[...], preferred_element_type=f32)     # f32 accumulate
    y1 = _elu(y1 + b1_ref[...].astype(f32)).reshape(TB, N1p, Dp)

    # ---- branch 2: snn2(norm2(x2)).mean(dim=1) ------------------------------
    x2 = x2_ref[...].astype(f32)
    ms2 = jnp.sum(x2 * x2, axis=-1, keepdims=True) * inv_d
    h2 = x2 * lax.rsqrt(ms2 + EPS) * g2_ref[...].astype(f32)
    h2 = h2.astype(w2_ref.dtype).reshape(TB * N2p, Dp)
    y2 = jnp.dot(h2, w2_ref[...], preferred_element_type=f32)
    b2f = b2_ref[...].astype(f32)                                  # (1, Dp)
    y2 = _elu(y2 + b2f).reshape(TB, N2p, Dp)

    y2_sum = jnp.sum(y2, axis=1, keepdims=True)                    # (TB, 1, Dp)
    if N2p != n2_true:
        # Padded h2 rows are exactly zero, so each padded row contributes exactly ELU(b2)
        # to the sum: subtract analytically instead of a full-tile iota/compare/select mask.
        y2_sum = y2_sum - float(N2p - n2_true) * _elu(b2f)
    y2_mean = y2_sum * inv_n2                                      # true-N2 mean

    # ---- fuse: broadcast-add the per-batch mean over branch-1 tokens --------
    o_ref[...] = (y1 + y2_mean).astype(o_ref.dtype)


def snn_fusion(x1, x2, params, *, mxu_dtype=jnp.bfloat16, act_dtype=jnp.bfloat16):
    """SNNFusion forward.  x1: (B, N1, D), x2: (B, N2, D) -> (B, N1, D)."""
    B, N1, D = x1.shape
    B2, N2, D2 = x2.shape
    assert B2 == B and D2 == D
    out_dtype = x1.dtype

    # Lane-dense / sublane-aligned padded shapes (no-ops when already aligned, e.g. D=256).
    Dp = _round_up(D, 128)
    N1p = _round_up(N1, 8)
    N2p = _round_up(N2, 8)

    act_bytes = jnp.dtype(act_dtype).itemsize
    out_bytes = jnp.dtype(out_dtype).itemsize
    w_bytes = jnp.dtype(mxu_dtype).itemsize

    # --- batch-block (TB) selection: VMEM-budget driven, decoupled from divisors of B ---
    vmem_cap = _vmem_capacity_bytes()
    weight_bytes = 2 * Dp * Dp * w_bytes                           # w1 + w2, one copy each
    per_batch_block = Dp * (act_bytes * (N1p + N2p) + out_bytes * N1p)   # DMA'd per batch elem
    per_batch_live = 3 * Dp * 4 * (N1p + N2p)                      # in-kernel f32 temps (x/h/y)
    act_budget = max(4 << 20, int(0.4 * vmem_cap) - 2 * weight_bytes)
    tb_vmem = max(1, act_budget // (2 * per_batch_block + per_batch_live))
    TB = max(1, min(B, tb_vmem))
    if B >= 2:
        # Keep >= 2 "parallel" grid steps so v7x's two TensorCores both get work; on 1-TC
        # parts this only adds one ~0.35us step to an HBM-bound kernel.
        TB = min(TB, _cdiv(B, 2))
    Bp = _round_up(B, TB)          # pad B up instead of shrinking TB to a divisor of B
    grid = (Bp // TB,)

    # Grid-invariant weights: single-buffer only when their footprint actually matters
    # (production D); at small D the default double-buffered path is used (and tested).
    use_single_buffered_params = _supports_pipeline_mode() and (2 * weight_bytes >= (8 << 20))
    param_kw = {"pipeline_mode": pl.Buffered(1)} if use_single_buffered_params else {}

    # Zero-padding keeps the math exact: padded lanes/rows of x/g/w/b are zero, so they
    # contribute nothing; padded output lanes/rows are sliced off below.  bf16 activation
    # I/O halves kernel HBM traffic and per-block VMEM (no-op if inputs are already bf16).
    x1p = _pad_to(x1, (Bp, N1p, Dp)).astype(act_dtype)
    x2p = _pad_to(x2, (Bp, N2p, Dp)).astype(act_dtype)
    g1 = _pad_to(params["g1"], (1, Dp)).astype(jnp.float32)
    b1 = _pad_to(params["b1"], (1, Dp)).astype(jnp.float32)
    g2 = _pad_to(params["g2"], (1, Dp)).astype(jnp.float32)
    b2 = _pad_to(params["b2"], (1, Dp)).astype(jnp.float32)
    w1 = _pad_to(params["w1"], (Dp, Dp)).astype(mxu_dtype)          # bf16 weights for the MXU
    w2 = _pad_to(params["w2"], (Dp, Dp)).astype(mxu_dtype)

    weight_copies = 1 if use_single_buffered_params else 2
    est = (2 * TB * per_batch_block            # double-buffered activation/output blocks
           + weight_copies * weight_bytes      # weight residency
           + 2 * 4 * Dp * 4                    # gain/bias vectors (double-buffered, f32)
           + TB * per_batch_live)              # in-kernel f32 temporaries
    vmem_limit_bytes = int(min(max(2 * est, 16 << 20), int(0.85 * vmem_cap)))

    kernel = functools.partial(snn_fusion_kernel, d_true=D, n2_true=N2)

    x1_spec = pl.BlockSpec((TB, N1p, Dp), lambda b: (b, 0, 0))
    x2_spec = pl.BlockSpec((TB, N2p, Dp), lambda b: (b, 0, 0))
    vec_spec = pl.BlockSpec((1, Dp), lambda b: (0, 0), **param_kw)
    mat_spec = pl.BlockSpec((Dp, Dp), lambda b: (0, 0), **param_kw)
    out_spec = pl.BlockSpec((TB, N1p, Dp), lambda b: (b, 0, 0))

    out_p = pl.pallas_call(
        kernel,
        out_shape=jax.ShapeDtypeStruct((Bp, N1p, Dp), out_dtype),
        grid_spec=pltpu.PrefetchScalarGridSpec(
            num_scalar_prefetch=0,
            grid=grid,
            in_specs=[x1_spec, x2_spec,
                      vec_spec, mat_spec, vec_spec,
                      vec_spec, mat_spec, vec_spec],
            out_specs=out_spec,
        ),
        compiler_params=pltpu.CompilerParams(
            dimension_semantics=("parallel",),
            vmem_limit_bytes=vmem_limit_bytes,
        ),
    )(x1p, x2p, g1, w1, b1, g2, w2, b2)

    # Slices are no-ops (elided by XLA) when nothing was padded (e.g. D=256, aligned N1, B).
    return out_p[:B, :N1, :D]


def reference(x1, x2, params):
    """Pure-JAX f32 reference for SNNFusion (eval mode)."""
    def rms(x, g):
        ms = jnp.mean(x * x, axis=-1, keepdims=True)
        return x * lax.rsqrt(ms + EPS) * g

    h1 = rms(x1.astype(jnp.float32), params["g1"][0])
    y1 = jax.nn.elu(h1 @ params["w1"] + params["b1"][0])
    h2 = rms(x2.astype(jnp.float32), params["g2"][0])
    y2 = jax.nn.elu(h2 @ params["w2"] + params["b2"][0])
    return y1 + jnp.mean(y2, axis=1, keepdims=True)


def init_params(key, dim):
    k1, k2, k3, k4 = jax.random.split(key, 4)
    scale = 1.0 / jnp.sqrt(dim)
    return dict(
        g1=jnp.ones((1, dim), jnp.float32),                                 # RMSNorm weight
        w1=jax.random.uniform(k1, (dim, dim), jnp.float32, -scale, scale),  # Linear weight (in, out)
        b1=jax.random.uniform(k2, (1, dim), jnp.float32, -scale, scale),    # Linear bias
        g2=jnp.ones((1, dim), jnp.float32),
        w2=jax.random.uniform(k3, (dim, dim), jnp.float32, -scale, scale),
        b2=jax.random.uniform(k4, (1, dim), jnp.float32, -scale, scale),
    )
    # TODO(synk): AlphaDropout (p=0.25) inside SNN_Block is stochastic at train time;
    # implemented as identity (eval-mode forward).


if __name__ == "__main__":
    # dim=256 matches MCMoE's default (and is lane-dense); N2=6 exercises token padding.
    B, N1, N2, D = 2, 8, 6, 256

    key = jax.random.PRNGKey(0)
    kx1, kx2, kp = jax.random.split(key, 3)
    x1 = jax.random.normal(kx1, (B, N1, D), jnp.float32)
    x2 = jax.random.normal(kx2, (B, N2, D), jnp.float32)
    params = init_params(kp, D)

    out = jax.block_until_ready(snn_fusion(x1, x2, params))
    ref = reference(x1, x2, params)

    assert out.shape == (B, N1, D)
    assert out.dtype == x1.dtype
    # bf16 activation + bf16 MXU operands (f32 accumulate) vs. an all-f32 reference.
    assert jnp.allclose(out, ref, atol=5e-2, rtol=5e-2), "mismatch vs reference"

    print("KERNEL_OK")
</pallas_src>

<mosaic_0001>
module attributes {stable_mosaic.version = 11 : i64} {
  func.func @snn_fusion_kernel(%arg0: i32, %arg1: memref<1x8x256xbf16, #tpu.memory_space<vmem>>, %arg2: memref<1x8x256xbf16, #tpu.memory_space<vmem>>, %arg3: memref<1x256xf32, #tpu.memory_space<vmem>>, %arg4: memref<256x256xbf16, #tpu.memory_space<vmem>>, %arg5: memref<1x256xf32, #tpu.memory_space<vmem>>, %arg6: memref<1x256xf32, #tpu.memory_space<vmem>>, %arg7: memref<256x256xbf16, #tpu.memory_space<vmem>>, %arg8: memref<1x256xf32, #tpu.memory_space<vmem>>, %arg9: memref<1x8x256xf32, #tpu.memory_space<vmem>>) attributes {dimension_semantics = [#tpu.dimension_semantics<parallel>], iteration_bounds = array<i64: 2>, scalar_prefetch = 0 : i64, scratch_operands = 0 : i64, tpu.core_type = #tpu.core_type<tc>, window_params = [{transform_indices = @transform_0, window_bounds = array<i64: 1, 8, 256>}, {transform_indices = @transform_1, window_bounds = array<i64: 1, 8, 256>}, {pipeline_mode = #tpu.pipeline_mode<synchronous>, transform_indices = @transform_2, window_bounds = array<i64: 1, 256>}, {pipeline_mode = #tpu.pipeline_mode<synchronous>, transform_indices = @transform_3, window_bounds = array<i64: 256, 256>}, {pipeline_mode = #tpu.pipeline_mode<synchronous>, transform_indices = @transform_4, window_bounds = array<i64: 1, 256>}, {pipeline_mode = #tpu.pipeline_mode<synchronous>, transform_indices = @transform_5, window_bounds = array<i64: 1, 256>}, {pipeline_mode = #tpu.pipeline_mode<synchronous>, transform_indices = @transform_6, window_bounds = array<i64: 256, 256>}, {pipeline_mode = #tpu.pipeline_mode<synchronous>, transform_indices = @transform_7, window_bounds = array<i64: 1, 256>}, {transform_indices = @transform_8, window_bounds = array<i64: 1, 8, 256>}]} {
    %c0 = arith.constant 0 : index
    %c0_0 = arith.constant 0 : index
    %c0_1 = arith.constant 0 : index
    %0 = vector.load %arg1[%c0, %c0_0, %c0_1] : memref<1x8x256xbf16, #tpu.memory_space<vmem>>, vector<1x8x256xbf16>
    %1 = arith.extf %0 : vector<1x8x256xbf16> to vector<1x8x256xf32>
    %2 = arith.mulf %1, %1 : vector<1x8x256xf32>
    %cst = arith.constant dense<0.000000e+00> : vector<1x8xf32>
    %3 = vector.multi_reduction <add>, %2, %cst [2] : vector<1x8x256xf32> to vector<1x8xf32>
    %4 = vector.shape_cast %3 : vector<1x8xf32> to vector<1x8x1xf32>
    %cst_2 = arith.constant 3.906250e-03 : f32
    %5 = vector.broadcast %cst_2 : f32 to vector<1x8x1xf32>
    %6 = arith.mulf %4, %5 : vector<1x8x1xf32>
    %cst_3 = arith.constant 9.99999997E-7 : f32
    %7 = vector.broadcast %cst_3 : f32 to vector<1x8x1xf32>
    %8 = arith.addf %6, %7 : vector<1x8x1xf32>
    %9 = math.rsqrt %8 : vector<1x8x1xf32>
    %10 = vector.broadcast %9 : vector<1x8x1xf32> to vector<1x8x256xf32>
    %11 = arith.mulf %1, %10 : vector<1x8x256xf32>
    %c0_4 = arith.constant 0 : index
    %c0_5 = arith.constant 0 : index
    %12 = vector.load %arg3[%c0_4, %c0_5] : memref<1x256xf32, #tpu.memory_space<vmem>>, vector<1x256xf32>
    %13 = vector.shape_cast %12 : vector<1x256xf32> to vector<1x1x256xf32>
    %14 = vector.broadcast %13 : vector<1x1x256xf32> to vector<1x8x256xf32>
    %15 = arith.mulf %11, %14 : vector<1x8x256xf32>
    %16 = arith.truncf %15 : vector<1x8x256xf32> to vector<1x8x256xbf16>
    %17 = vector.shape_cast %16 : vector<1x8x256xbf16> to vector<8x256xbf16>
    %c0_6 = arith.constant 0 : index
    %c0_7 = arith.constant 0 : index
    %18 = vector.load %arg4[%c0_6, %c0_7] : memref<256x256xbf16, #tpu.memory_space<vmem>>, vector<256x256xbf16>
    %cst_8 = arith.constant dense<0.000000e+00> : vector<8x256xf32>
    %19 = tpu.matmul %17, %18, %cst_8 {dimension_numbers = #tpu.dot_dimension_numbers<[1], [0], [0], [1], [0, 0, 1, 1], [], []>} : vector<8x256xbf16>, vector<256x256xbf16>, vector<8x256xf32> -> vector<8x256xf32>
    %c0_9 = arith.constant 0 : index
    %c0_10 = arith.constant 0 : index
    %20 = vector.load %arg5[%c0_9, %c0_10] : memref<1x256xf32, #tpu.memory_space<vmem>>, vector<1x256xf32>
    %21 = vector.broadcast %20 : vector<1x256xf32> to vector<8x256xf32>
    %22 = arith.addf %19, %21 : vector<8x256xf32>
    %cst_11 = arith.constant 0.000000e+00 : f32
    %23 = vector.broadcast %cst_11 : f32 to vector<8x256xf32>
    %24 = arith.cmpf ogt, %22, %23 : vector<8x256xf32>
    %cst_12 = arith.constant 0.000000e+00 : f32
    %25 = vector.broadcast %cst_12 : f32 to vector<8x256xf32>
    %26 = arith.minimumf %22, %25 : vector<8x256xf32>
    %27 = math.exp %26 : vector<8x256xf32>
    %cst_13 = arith.constant 1.000000e+00 : f32
    %28 = vector.broadcast %cst_13 : f32 to vector<8x256xf32>
    %29 = arith.subf %27, %28 : vector<8x256xf32>
    %30 = arith.select %24, %22, %29 : vector<8x256xi1>, vector<8x256xf32>
    %31 = vector.shape_cast %30 : vector<8x256xf32> to vector<1x8x256xf32>
    %c0_14 = arith.constant 0 : index
    %c0_15 = arith.constant 0 : index
    %c0_16 = arith.constant 0 : index
    %32 = vector.load %arg2[%c0_14, %c0_15, %c0_16] : memref<1x8x256xbf16, #tpu.memory_space<vmem>>, vector<1x8x256xbf16>
    %33 = arith.extf %32 : vector<1x8x256xbf16> to vector<1x8x256xf32>
    %34 = arith.mulf %33, %33 : vector<1x8x256xf32>
    %cst_17 = arith.constant dense<0.000000e+00> : vector<1x8xf32>
    %35 = vector.multi_reduction <add>, %34, %cst_17 [2] : vector<1x8x256xf32> to vector<1x8xf32>
    %36 = vector.shape_cast %35 : vector<1x8xf32> to vector<1x8x1xf32>
    %cst_18 = arith.constant 3.906250e-03 : f32
    %37 = vector.broadcast %cst_18 : f32 to vector<1x8x1xf32>
    %38 = arith.mulf %36, %37 : vector<1x8x1xf32>
    %cst_19 = arith.constant 9.99999997E-7 : f32
    %39 = vector.broadcast %cst_19 : f32 to vector<1x8x1xf32>
    %40 = arith.addf %38, %39 : vector<1x8x1xf32>
    %41 = math.rsqrt %40 : vector<1x8x1xf32>
    %42 = vector.broadcast %41 : vector<1x8x1xf32> to vector<1x8x256xf32>
    %43 = arith.mulf %33, %42 : vector<1x8x256xf32>
    %c0_20 = arith.constant 0 : index
    %c0_21 = arith.constant 0 : index
    %44 = vector.load %arg6[%c0_20, %c0_21] : memref<1x256xf32, #tpu.memory_space<vmem>>, vector<1x256xf32>
    %45 = vector.shape_cast %44 : vector<1x256xf32> to vector<1x1x256xf32>
    %46 = vector.broadcast %45 : vector<1x1x256xf32> to vector<1x8x256xf32>
    %47 = arith.mulf %43, %46 : vector<1x8x256xf32>
    %48 = arith.truncf %47 : vector<1x8x256xf32> to vector<1x8x256xbf16>
    %49 = vector.shape_cast %48 : vector<1x8x256xbf16> to vector<8x256xbf16>
    %c0_22 = arith.constant 0 : index
    %c0_23 = arith.constant 0 : index
    %50 = vector.load %arg7[%c0_22, %c0_23] : memref<256x256xbf16, #tpu.memory_space<vmem>>, vector<256x256xbf16>
    %cst_24 = arith.constant dense<0.000000e+00> : vector<8x256xf32>
    %51 = tpu.matmul %49, %50, %cst_24 {dimension_numbers = #tpu.dot_dimension_numbers<[1], [0], [0], [1], [0, 0, 1, 1], [], []>} : vector<8x256xbf16>, vector<256x256xbf16>, vector<8x256xf32> -> vector<8x256xf32>
    %c0_25 = arith.constant 0 : index
    %c0_26 = arith.constant 0 : index
    %52 = vector.load %arg8[%c0_25, %c0_26] : memref<1x256xf32, #tpu.memory_space<vmem>>, vector<1x256xf32>
    %53 = vector.broadcast %52 : vector<1x256xf32> to vector<8x256xf32>
    %54 = arith.addf %51, %53 : vector<8x256xf32>
    %cst_27 = arith.constant 0.000000e+00 : f32
    %55 = vector.broadcast %cst_27 : f32 to vector<8x256xf32>
    %56 = arith.cmpf ogt, %54, %55 : vector<8x256xf32>
    %cst_28 = arith.constant 0.000000e+00 : f32
    %57 = vector.broadcast %cst_28 : f32 to vector<8x256xf32>
    %58 = arith.minimumf %54, %57 : vector<8x256xf32>
    %59 = math.exp %58 : vector<8x256xf32>
    %cst_29 = arith.constant 1.000000e+00 : f32
    %60 = vector.broadcast %cst_29 : f32 to vector<8x256xf32>
    %61 = arith.subf %59, %60 : vector<8x256xf32>
    %62 = arith.select %56, %54, %61 : vector<8x256xi1>, vector<8x256xf32>
    %63 = vector.shape_cast %62 : vector<8x256xf32> to vector<1x8x256xf32>
    %cst_30 = arith.constant dense<0.000000e+00> : vector<1x256xf32>
    %64 = vector.multi_reduction <add>, %63, %cst_30 [1] : vector<1x8x256xf32> to vector<1x256xf32>
    %65 = vector.shape_cast %64 : vector<1x256xf32> to vector<1x1x256xf32>
    %cst_31 = arith.constant 0.000000e+00 : f32
    %66 = vector.broadcast %cst_31 : f32 to vector<1x256xf32>
    %67 = arith.cmpf ogt, %52, %66 : vector<1x256xf32>
    %cst_32 = arith.constant 0.000000e+00 : f32
    %68 = vector.broadcast %cst_32 : f32 to vector<1x256xf32>
    %69 = arith.minimumf %52, %68 : vector<1x256xf32>
    %70 = math.exp %69 : vector<1x256xf32>
    %cst_33 = arith.constant 1.000000e+00 : f32
    %71 = vector.broadcast %cst_33 : f32 to vector<1x256xf32>
    %72 = arith.subf %70, %71 : vector<1x256xf32>
    %73 = arith.select %67, %52, %72 : vector<1x256xi1>, vector<1x256xf32>
    %cst_34 = arith.constant 2.000000e+00 : f32
    %74 = vector.broadcast %cst_34 : f32 to vector<1x256xf32>
    %75 = arith.mulf %74, %73 : vector<1x256xf32>
    %76 = vector.shape_cast %75 : vector<1x256xf32> to vector<1x1x256xf32>
    %77 = arith.subf %65, %76 : vector<1x1x256xf32>
    %cst_35 = arith.constant 0.166666672 : f32
    %78 = vector.broadcast %cst_35 : f32 to vector<1x1x256xf32>
    %79 = arith.mulf %77, %78 : vector<1x1x256xf32>
    %80 = vector.broadcast %79 : vector<1x1x256xf32> to vector<1x8x256xf32>
    %81 = arith.addf %31, %80 : vector<1x8x256xf32>
    %c0_36 = arith.constant 0 : index
    %c0_37 = arith.constant 0 : index
    %c0_38 = arith.constant 0 : index
    %82 = vector.load %arg9[%c0_36, %c0_37, %c0_38] : memref<1x8x256xf32, #tpu.memory_space<vmem>>, vector<1x8x256xf32>
    tpu.vector_store %arg9[%c0_36, %c0_37, %c0_38], %81 {strides = array<i32>} : memref<1x8x256xf32, #tpu.memory_space<vmem>>, vector<1x8x256xf32>,
    return
  }
  func.func @transform_0(%arg0: i32) -> (i32, i32, i32) {
    %c0_i32 = arith.constant 0 : i32
    %c0_i32_0 = arith.constant 0 : i32
    %c0_i32_1 = arith.constant 0 : i32
    return %arg0, %c0_i32, %c0_i32_0 : i32, i32, i32
  }
  func.func @transform_1(%arg0: i32) -> (i32, i32, i32) {
    %c0_i32 = arith.constant 0 : i32
    %c0_i32_0 = arith.constant 0 : i32
    %c0_i32_1 = arith.constant 0 : i32
    return %arg0, %c0_i32, %c0_i32_0 : i32, i32, i32
  }
  func.func @transform_2(%arg0: i32) -> (i32, i32) {
    %c0_i32 = arith.constant 0 : i32
    %c0_i32_0 = arith.constant 0 : i32
    %c0_i32_1 = arith.constant 0 : i32
    return %c0_i32, %c0_i32_0 : i32, i32
  }
  func.func @transform_3(%arg0: i32) -> (i32, i32) {
    %c0_i32 = arith.constant 0 : i32
    %c0_i32_0 = arith.constant 0 : i32
    %c0_i32_1 = arith.constant 0 : i32
    return %c0_i32, %c0_i32_0 : i32, i32
  }
  func.func @transform_4(%arg0: i32) -> (i32, i32) {
    %c0_i32 = arith.constant 0 : i32
    %c0_i32_0 = arith.constant 0 : i32
    %c0_i32_1 = arith.constant 0 : i32
    return %c0_i32, %c0_i32_0 : i32, i32
  }
  func.func @transform_5(%arg0: i32) -> (i32, i32) {
    %c0_i32 = arith.constant 0 : i32
    %c0_i32_0 = arith.constant 0 : i32
    %c0_i32_1 = arith.constant 0 : i32
    return %c0_i32, %c0_i32_0 : i32, i32
  }
  func.func @transform_6(%arg0: i32) -> (i32, i32) {
    %c0_i32 = arith.constant 0 : i32
    %c0_i32_0 = arith.constant 0 : i32
    %c0_i32_1 = arith.constant 0 : i32
    return %c0_i32, %c0_i32_0 : i32, i32
  }
  func.func @transform_7(%arg0: i32) -> (i32, i32) {
    %c0_i32 = arith.constant 0 : i32
    %c0_i32_0 = arith.constant 0 : i32
    %c0_i32_1 = arith.constant 0 : i32
    return %c0_i32, %c0_i32_0 : i32, i32
  }
  func.func @transform_8(%arg0: i32) -> (i32, i32, i32) {
    %c0_i32 = arith.constant 0 : i32
    %c0_i32_0 = arith.constant 0 : i32
    %c0_i32_1 = arith.constant 0 : i32
    return %arg0, %c0_i32, %c0_i32_0 : i32, i32, i32
  }
}

</mosaic_0001>

<llo_original>
// kernel: tpu_custom_call.1
$region0: #{tpu_custom_call.1}
  #allocation0 [shape = 'u32[]', space=smem, size = 0x4, offset = 0x4, fixed_abs, tag = 'smem constant byte address 0x4 - core index']
  #allocation1 [shape = 'u32[144,128]{1,0:T(1,128)}', space=vmem, size = 0x12000, scoped, tag = 'internal scratch']
  %s0 = inlined_call_operand.hbm [shape: bf16[2,8,256], index: 0, kind: input, shape index: {}]
  %s1 = inlined_call_operand.hbm [shape: bf16[2,8,256], index: 1, kind: input, shape index: {}]
  %s2 = inlined_call_operand.vmem [shape: f32[1,256], index: 2, kind: input, shape index: {}]
  %s3 = inlined_call_operand.hbm [shape: bf16[256,256], index: 3, kind: input, shape index: {}]
  %s4 = inlined_call_operand.vmem [shape: f32[1,256], index: 4, kind: input, shape index: {}]
  %s5 = inlined_call_operand.vmem [shape: f32[1,256], index: 5, kind: input, shape index: {}]
  %s6 = inlined_call_operand.hbm [shape: bf16[256,256], index: 6, kind: input, shape index: {}]
  %s7 = inlined_call_operand.vmem [shape: f32[1,256], index: 7, kind: input, shape index: {}]
  %s8 = inlined_call_operand.hbm [shape: f32[2,8,256], index: 8, kind: output, shape index: {}]
  %s9 = sld [smem:[#allocation0]]
  $region81: #{tpu_custom_call.1} parent=0
    _
  %s11 = ssub.s32 1, %s9
  %s12 = scalar_select 0, %s11, %s9
  $region1: #{tpu_custom_call.1} parent=0
    #allocation2 [shape = 'u8[8192]{0}', space=vmem, size = 0x2000, scoped, tag = 'input window, operand 0']
    #allocation3 [shape = 's32[2]{0}', space=sflag, size = 0x8, scoped, tag = 'scoped memory for tpu_custom_call.1']
    #allocation4 [shape = 's32[2]{0}', space=sflag, size = 0x8, scoped, tag = 'scoped memory for tpu_custom_call.1']
    #allocation5 [shape = 'u8[8192]{0}', space=vmem, size = 0x2000, scoped, tag = 'input window, operand 1']
    #allocation6 [shape = 's32[2]{0}', space=sflag, size = 0x8, scoped, tag = 'scoped memory for tpu_custom_call.1']
    #allocation7 [shape = 'u8[131072]{0}', space=vmem, size = 0x20000, scoped, tag = 'input window, operand 3, single buffered']
    #allocation8 [shape = 'u8[131072]{0}', space=vmem, size = 0x20000, scoped, tag = 'input window, operand 6, single buffered']
    #allocation9 [shape = 's32[1]{0}', space=sflag, size = 0x4, scoped, tag = 'scoped memory for tpu_custom_call.1']
    #allocation10 [shape = 'u8[16384]{0}', space=vmem, size = 0x4000, scoped, tag = 'output window, operand 0']
    %13 = vsyncpa [#allocation3], 0
    %s14 = scalar_lea.sflag [#allocation3], 1
    %15 = vsyncpa %s14, 0
    %16 = vsyncpa [#allocation6], 0
    %s17 = scalar_lea.sflag [#allocation6], 1
    %18 = vsyncpa %s17, 0
    %19 = vsyncpa [#allocation9], 0
    %20 = vsyncpa [#allocation4], 0
    %s21 = scalar_lea.sflag [#allocation4], 1
    %22 = vsyncpa %s21, 0
    loop: start=0, step=1, limit=4
    $region2: #{tpu_custom_call.1} parent=1 // loop_pre_header
      _
    $region3: #{tpu_custom_call.1} parent=1 // loop_header
      %s24 = sphi 0, %s28
      %p25 = scmp.ge.s32.totalorder %s24, 4
      %s34 = sphi 0, %s36
      %s37 = sphi 0, %s34
      %s38 = sphi 0, %s37
      %s54 = sphi 0, %s38
      %s60 = sphi 0, %s62
      %s63 = sphi 0, %s60
      %s64 = sphi 0, %s63
      %s80 = sphi 0, %s64
      %s84 = sphi 0, %s84
      %s86 = sphi 0, %s84
      %s87 = sphi 0, %s86
      %s101 = sphi 0, %s87
      %s105 = sphi 0, %s105
      %s107 = sphi 0, %s105
      %s108 = sphi 0, %s107
      %s122 = sphi 0, %s108
      %s126 = sphi 0, %s126
      %s128 = sphi 0, %s126
      %s129 = sphi 0, %s128
      %s143 = sphi 0, %s129
      %s147 = sphi 0, %s147
      %s149 = sphi 0, %s147
      %s150 = sphi 0, %s149
      %s164 = sphi 0, %s150
      %s168 = sphi 0, %s168
      %s170 = sphi 0, %s168
      %s171 = sphi 0, %s170
      %s185 = sphi 0, %s171
      %s189 = sphi 0, %s189
      %s191 = sphi 0, %s189
      %s192 = sphi 0, %s191
      %s206 = sphi 0, %s192
      %s212 = sphi 0, %s214
      %s215 = sphi 0, %s212
      %s216 = sphi 0, %s215
      %s232 = sphi 0, %s216
    $region4: #{tpu_custom_call.1} parent=1 // loop_header_branch
      %27 = sbr.rel (%p25) target = $region8
    $region5: #{tpu_custom_call.1} parent=1 // loop_body
      %s29 = ssub.s32 %s24, 1
      %s30 = ssub.s32 %s24, 2
      %s31 = sadd.s32 %s24, 1
      %s32 = ssub.s32 %s24, %s31
      %p33 = scmp.eq.s32.totalorder %s32, 0
      %s35 = sadd.s32 %s34, 1
      %s36 = scalar_select %p33, %s34, %s35
      %p39 = pneg %p33
      %p40 = scmp.eq.s32.totalorder %s24, 1
      %p41 = por %p39, %p40
      %p42 = scmp.ne.s32.totalorder %s34, %s37
      %p43 = scmp.eq.s32.totalorder %s24, 0
      %p44 = por %p42, %p43
      %p45 = scmp.ne.s32.totalorder %s34, %s37
      %p46 = scmp.eq.s32.totalorder %s29, 1
      %p47 = por %p45, %p46
      %p48 = scmp.ne.s32.totalorder %s37, %s38
      %p49 = scmp.eq.s32.totalorder %s29, 0
      %p50 = por %p48, %p49
      %p51 = scmp.ne.s32.totalorder %s37, %s38
      %p52 = scmp.eq.s32.totalorder %s30, 1
      %p53 = por %p51, %p52
      %p55 = scmp.ne.s32.totalorder %s38, %s54
      %p56 = scmp.eq.s32.totalorder %s30, 0
      %p57 = por %p55, %p56
      %s58 = ssub.s32 %s24, %s31
      %p59 = scmp.eq.s32.totalorder %s58, 0
      %s61 = sadd.s32 %s60, 1
      %s62 = scalar_select %p59, %s60, %s61
      %p65 = pneg %p59
      %p66 = scmp.eq.s32.totalorder %s24, 1
      %p67 = por %p65, %p66
      %p68 = scmp.ne.s32.totalorder %s60, %s63
      %p69 = scmp.eq.s32.totalorder %s24, 0
      %p70 = por %p68, %p69
      %p71 = scmp.ne.s32.totalorder %s60, %s63
      %p72 = scmp.eq.s32.totalorder %s29, 1
      %p73 = por %p71, %p72
      %p74 = scmp.ne.s32.totalorder %s63, %s64
      %p75 = scmp.eq.s32.totalorder %s29, 0
      %p76 = por %p74, %p75
      %p77 = scmp.ne.s32.totalorder %s63, %s64
      %p78 = scmp.eq.s32.totalorder %s30, 1
      %p79 = por %p77, %p78
      %p81 = scmp.ne.s32.totalorder %s64, %s80
      %p82 = scmp.eq.s32.totalorder %s30, 0
      %p83 = por %p81, %p82
      %s85 = sadd.s32 %s84, 1
      %p88 = scmp.eq.s32.totalorder %s24, 1
      %p89 = scmp.ne.s32.totalorder %s84, %s86
      %p90 = scmp.eq.s32.totalorder %s24, 0
      %p91 = por %p89, %p90
      %p92 = scmp.ne.s32.totalorder %s84, %s86
      %p93 = scmp.eq.s32.totalorder %s29, 1
      %p94 = por %p92, %p93
      %p95 = scmp.ne.s32.totalorder %s86, %s87
      %p96 = scmp.eq.s32.totalorder %s29, 0
      %p97 = por %p95, %p96
      %p98 = scmp.ne.s32.totalorder %s86, %s87
      %p99 = scmp.eq.s32.totalorder %s30, 1
      %p100 = por %p98, %p99
      %p102 = scmp.ne.s32.totalorder %s87, %s101
      %p103 = scmp.eq.s32.totalorder %s30, 0
      %p104 = por %p102, %p103
      %s106 = sadd.s32 %s105, 1
      %p109 = scmp.eq.s32.totalorder %s24, 1
      %p110 = scmp.ne.s32.totalorder %s105, %s107
      %p111 = scmp.eq.s32.totalorder %s24, 0
      %p112 = por %p110, %p111
      %p113 = scmp.ne.s32.totalorder %s105, %s107
      %p114 = scmp.eq.s32.totalorder %s29, 1
      %p115 = por %p113, %p114
      %p116 = scmp.ne.s32.totalorder %s107, %s108
      %p117 = scmp.eq.s32.totalorder %s29, 0
      %p118 = por %p116, %p117
      %p119 = scmp.ne.s32.totalorder %s107, %s108
      %p120 = scmp.eq.s32.totalorder %s30, 1
      %p121 = por %p119, %p120
      %p123 = scmp.ne.s32.totalorder %s108, %s122
      %p124 = scmp.eq.s32.totalorder %s30, 0
      %p125 = por %p123, %p124
      %s127 = sadd.s32 %s126, 1
      %p130 = scmp.eq.s32.totalorder %s24, 1
      %p131 = scmp.ne.s32.totalorder %s126, %s128
      %p132 = scmp.eq.s32.totalorder %s24, 0
      %p133 = por %p131, %p132
      %p134 = scmp.ne.s32.totalorder %s126, %s128
      %p135 = scmp.eq.s32.totalorder %s29, 1
      %p136 = por %p134, %p135
      %p137 = scmp.ne.s32.totalorder %s128, %s129
      %p138 = scmp.eq.s32.totalorder %s29, 0
      %p139 = por %p137, %p138
      %p140 = scmp.ne.s32.totalorder %s128, %s129
      %p141 = scmp.eq.s32.totalorder %s30, 1
      %p142 = por %p140, %p141
      %p144 = scmp.ne.s32.totalorder %s129, %s143
      %p145 = scmp.eq.s32.totalorder %s30, 0
      %p146 = por %p144, %p145
      %s148 = sadd.s32 %s147, 1
      %p151 = scmp.eq.s32.totalorder %s24, 1
      %p152 = scmp.ne.s32.totalorder %s147, %s149
      %p153 = scmp.eq.s32.totalorder %s24, 0
      %p154 = por %p152, %p153
      %p155 = scmp.ne.s32.totalorder %s147, %s149
      %p156 = scmp.eq.s32.totalorder %s29, 1
      %p157 = por %p155, %p156
      %p158 = scmp.ne.s32.totalorder %s149, %s150
      %p159 = scmp.eq.s32.totalorder %s29, 0
      %p160 = por %p158, %p159
      %p161 = scmp.ne.s32.totalorder %s149, %s150
      %p162 = scmp.eq.s32.totalorder %s30, 1
      %p163 = por %p161, %p162
      %p165 = scmp.ne.s32.totalorder %s150, %s164
      %p166 = scmp.eq.s32.totalorder %s30, 0
      %p167 = por %p165, %p166
      %s169 = sadd.s32 %s168, 1
      %p172 = scmp.eq.s32.totalorder %s24, 1
      %p173 = scmp.ne.s32.totalorder %s168, %s170
      %p174 = scmp.eq.s32.totalorder %s24, 0
      %p175 = por %p173, %p174
      %p176 = scmp.ne.s32.totalorder %s168, %s170
      %p177 = scmp.eq.s32.totalorder %s29, 1
      %p178 = por %p176, %p177
      %p179 = scmp.ne.s32.totalorder %s170, %s171
      %p180 = scmp.eq.s32.totalorder %s29, 0
      %p181 = por %p179, %p180
      %p182 = scmp.ne.s32.totalorder %s170, %s171
      %p183 = scmp.eq.s32.totalorder %s30, 1
      %p184 = por %p182, %p183
      %p186 = scmp.ne.s32.totalorder %s171, %s185
      %p187 = scmp.eq.s32.totalorder %s30, 0
      %p188 = por %p186, %p187
      %s190 = sadd.s32 %s189, 1
      %p193 = scmp.eq.s32.totalorder %s24, 1
      %p194 = scmp.ne.s32.totalorder %s189, %s191
      %p195 = scmp.eq.s32.totalorder %s24, 0
      %p196 = por %p194, %p195
      %p197 = scmp.ne.s32.totalorder %s189, %s191
      %p198 = scmp.eq.s32.totalorder %s29, 1
      %p199 = por %p197, %p198
      %p200 = scmp.ne.s32.totalorder %s191, %s192
      %p201 = scmp.eq.s32.totalorder %s29, 0
      %p202 = por %p200, %p201
      %p203 = scmp.ne.s32.totalorder %s191, %s192
      %p204 = scmp.eq.s32.totalorder %s30, 1
      %p205 = por %p203, %p204
      %p207 = scmp.ne.s32.totalorder %s192, %s206
      %p208 = scmp.eq.s32.totalorder %s30, 0
      %p209 = por %p207, %p208
      %s210 = ssub.s32 %s24, %s31
      %p211 = scmp.eq.s32.totalorder %s210, 0
      %s213 = sadd.s32 %s212, 1
      %s214 = scalar_select %p211, %s212, %s213
      %p217 = pneg %p211
      %p218 = scmp.eq.s32.totalorder %s24, 1
      %p219 = por %p217, %p218
      %p220 = scmp.ne.s32.totalorder %s212, %s215
      %p221 = scmp.eq.s32.totalorder %s24, 0
      %p222 = por %p220, %p221
      %p223 = scmp.ne.s32.totalorder %s212, %s215
      %p224 = scmp.eq.s32.totalorder %s29, 1
      %p225 = por %p223, %p224
      %p226 = scmp.ne.s32.totalorder %s215, %s216
      %p227 = scmp.eq.s32.totalorder %s29, 0
      %p228 = por %p226, %p227
      %p229 = scmp.ne.s32.totalorder %s215, %s216
      %p230 = scmp.eq.s32.totalorder %s30, 1
      %p231 = por %p229, %p230
      %p233 = scmp.ne.s32.totalorder %s216, %s232
      %p234 = scmp.eq.s32.totalorder %s30, 0
      %p235 = por %p233, %p234
      %p236 = scmp.le.s32.totalorder 1, %s24
      %p237 = scmp.lt.s32.totalorder %s24, 3
      %p238 = pnand %p236, %p237
      %p239 = pneg %p238
      // Predicated region
      $region9: #{tpu_custom_call.1} parent=5 // pred_check
        _
      $region10: #{tpu_custom_call.1} parent=5 // pred_check_branch
        %241 = sbr.rel (%p238) target = $region12
      $region11: #{tpu_custom_call.1} parent=5 // pred_region
        %s242 = ssub.s32 %s24, 1
        // Predicated region
        $region13: #{tpu_custom_call.1} parent=11 // pred_check
          %p243 = pneg %p97
        $region14: #{tpu_custom_call.1} parent=11 // pred_check_branch
          %245 = sbr.rel (%p243) target = $region16
        $region15: #{tpu_custom_call.1} parent=11 // pred_region
          _
        $region16: #{tpu_custom_call.1} parent=11 // pred_fallthru
          _
        // Predicated region
        $region17: #{tpu_custom_call.1} parent=11 // pred_check
          %p246 = pneg %p118
        $region18: #{tpu_custom_call.1} parent=11 // pred_check_branch
          %248 = sbr.rel (%p246) target = $region20
        $region19: #{tpu_custom_call.1} parent=11 // pred_region
          %s250 = ssub.s32 4096, 4096
          %251 = vsyncadd [#allocation6], %s250
          %s252 = sshll.u32 [#allocation7], 4
          %s253 = int_to_ptr.vmem [resolvable:$true] %s252
          %258 = dma.hbm_to_vmem [thread:$0]  %s3, 4096, %s253, [#allocation6], 128, 128, 8
        $region20: #{tpu_custom_call.1} parent=11 // pred_fallthru
          _
        // Predicated region
        $region21: #{tpu_custom_call.1} parent=11 // pred_check
          %p259 = pneg %p139
        $region22: #{tpu_custom_call.1} parent=11 // pred_check_branch
          %261 = sbr.rel (%p259) target = $region24
        $region23: #{tpu_custom_call.1} parent=11 // pred_region
          _
        $region24: #{tpu_custom_call.1} parent=11 // pred_fallthru
          _
        // Predicated region
        $region25: #{tpu_custom_call.1} parent=11 // pred_check
          %p262 = pneg %p160
        $region26: #{tpu_custom_call.1} parent=11 // pred_check_branch
          %264 = sbr.rel (%p262) target = $region28
        $region27: #{tpu_custom_call.1} parent=11 // pred_region
          _
        $region28: #{tpu_custom_call.1} parent=11 // pred_fallthru
          _
        // Predicated region
        $region29: #{tpu_custom_call.1} parent=11 // pred_check
          %p265 = pneg %p181
        $region30: #{tpu_custom_call.1} parent=11 // pred_check_branch
          %267 = sbr.rel (%p265) target = $region32
        $region31: #{tpu_custom_call.1} parent=11 // pred_region
          %s269 = ssub.s32 4096, 4096
          %270 = vsyncadd [#allocation9], %s269
          %s271 = sshll.u32 [#allocation8], 4
          %s272 = int_to_ptr.vmem [resolvable:$true] %s271
          %277 = dma.hbm_to_vmem [thread:$0]  %s6, 4096, %s272, [#allocation9], 128, 128, 8
        $region32: #{tpu_custom_call.1} parent=11 // pred_fallthru
          _
        // Predicated region
        $region33: #{tpu_custom_call.1} parent=11 // pred_check
          %p278 = pneg %p202
        $region34: #{tpu_custom_call.1} parent=11 // pred_check_branch
          %280 = sbr.rel (%p278) target = $region36
        $region35: #{tpu_custom_call.1} parent=11 // pred_region
          _
        $region36: #{tpu_custom_call.1} parent=11 // pred_fallthru
          _
      $region12: #{tpu_custom_call.1} parent=5 // pred_fallthru
        _
      %p281 = scmp.lt.s32.totalorder %s24, 2
      // Predicated region
      $region37: #{tpu_custom_call.1} parent=5 // pred_check
        %p282 = pneg %p281
      $region38: #{tpu_custom_call.1} parent=5 // pred_check_branch
        %284 = sbr.rel (%p282) target = $region40
      $region39: #{tpu_custom_call.1} parent=5 // pred_region
        // Predicated region
        $region41: #{tpu_custom_call.1} parent=39 // pred_check
          %p285 = pneg %p44
        $region42: #{tpu_custom_call.1} parent=39 // pred_check_branch
          %287 = sbr.rel (%p285) target = $region44
        $region43: #{tpu_custom_call.1} parent=39 // pred_region
          %s288 = sand.u32 %s34, 1
          %s289 = scalar_lea.sflag [#allocation3], %s288
          %s290 = sand.u32 %s34, 1
          %s291 = smul.addr %s290, 8
          %s292 = scalar_lea.vmem [#allocation2], %s291
          %s294 = ssub.s32 128, 128
          %295 = vsyncadd %s289, %s294
          %s296 = smul.addr %s24, 2
          %s297 = smul.addr %s296, 64
          %s298 = scalar_lea.hbm %s0, %s297
          %s300 = sshll.u32 %s292, 4
          %s301 = int_to_ptr.vmem [resolvable:$true] %s300
          %303 = dma.hbm_to_vmem [thread:$0]  %s298, 128, %s301, %s289
        $region44: #{tpu_custom_call.1} parent=39 // pred_fallthru
          _
        // Predicated region
        $region45: #{tpu_custom_call.1} parent=39 // pred_check
          %p304 = pneg %p70
        $region46: #{tpu_custom_call.1} parent=39 // pred_check_branch
          %306 = sbr.rel (%p304) target = $region48
        $region47: #{tpu_custom_call.1} parent=39 // pred_region
          %s307 = sand.u32 %s24, 1
          %s308 = scalar_lea.sflag [#allocation6], %s307
          %s309 = sand.u32 %s60, 1
          %s310 = smul.addr %s309, 8
          %s311 = scalar_lea.vmem [#allocation5], %s310
          %s313 = ssub.s32 128, 128
          %314 = vsyncadd %s308, %s313
          %s315 = smul.addr %s24, 2
          %s316 = smul.addr %s315, 64
          %s317 = scalar_lea.hbm %s1, %s316
          %s319 = sshll.u32 %s311, 4
          %s320 = int_to_ptr.vmem [resolvable:$true] %s319
          %322 = dma.hbm_to_vmem [thread:$0]  %s317, 128, %s320, %s308
        $region48: #{tpu_custom_call.1} parent=39 // pred_fallthru
          _
      $region40: #{tpu_custom_call.1} parent=5 // pred_fallthru
        _
      %p323 = scmp.le.s32.totalorder 1, %s24
      %p324 = scmp.lt.s32.totalorder %s24, 3
      %p325 = pnand %p323, %p324
      %p326 = pneg %p325
      // Predicated region
      $region49: #{tpu_custom_call.1} parent=5 // pred_check
        _
      $region50: #{tpu_custom_call.1} parent=5 // pred_check_branch
        %328 = sbr.rel (%p325) target = $region52
      $region51: #{tpu_custom_call.1} parent=5 // pred_region
        %s329 = ssub.s32 %s24, 1
        %s330 = sand.u32 %s37, 1
        %s331 = scalar_lea.sflag [#allocation3], %s330
        %s332 = sand.u32 %s37, 1
        %s333 = smul.addr %s332, 8
        %s334 = scalar_lea.vmem [#allocation2], %s333
        // Predicated region
        $region53: #{tpu_custom_call.1} parent=51 // pred_check
          %p335 = pneg %p50
        $region54: #{tpu_custom_call.1} parent=51 // pred_check_branch
          %337 = sbr.rel (%p335) target = $region56
        $region55: #{tpu_custom_call.1} parent=51 // pred_region
          %338 = dma.done %s331, 128
        $region56: #{tpu_custom_call.1} parent=51 // pred_fallthru
          _
        %s339 = sand.u32 %s29, 1
        %s340 = scalar_lea.sflag [#allocation6], %s339
        %s341 = sand.u32 %s63, 1
        %s342 = smul.addr %s341, 8
        %s343 = scalar_lea.vmem [#allocation5], %s342
        // Predicated region
        $region57: #{tpu_custom_call.1} parent=51 // pred_check
          %p344 = pneg %p76
        $region58: #{tpu_custom_call.1} parent=51 // pred_check_branch
          %346 = sbr.rel (%p344) target = $region60
        $region59: #{tpu_custom_call.1} parent=51 // pred_region
          %347 = dma.done %s340, 128
        $region60: #{tpu_custom_call.1} parent=51 // pred_fallthru
          _
        // Predicated region
        $region61: #{tpu_custom_call.1} parent=51 // pred_check
          %p348 = pneg %p118
        $region62: #{tpu_custom_call.1} parent=51 // pred_check_branch
          %350 = sbr.rel (%p348) target = $region64
        $region63: #{tpu_custom_call.1} parent=51 // pred_region
          %351 = dma.done [#allocation6], 4096
        $region64: #{tpu_custom_call.1} parent=51 // pred_fallthru
          _
        // Predicated region
        $region65: #{tpu_custom_call.1} parent=51 // pred_check
          %p352 = pneg %p181
        $region66: #{tpu_custom_call.1} parent=51 // pred_check_branch
          %354 = sbr.rel (%p352) target = $region68
        $region67: #{tpu_custom_call.1} parent=51 // pred_region
          %355 = dma.done [#allocation9], 4096
        $region68: #{tpu_custom_call.1} parent=51 // pred_fallthru
          _
        %s356 = sand.u32 %s37, 1
        %s357 = scalar_lea.sflag [#allocation3], %s356
        %s358 = sand.u32 %s37, 1
        %s359 = smul.addr %s358, 8
        %s360 = scalar_lea.vmem [#allocation2], %s359
        %p361 = pneg %p50
        %p362 = pneg %p47
        %s363 = sand.u32 %s29, 1
        %s364 = scalar_lea.sflag [#allocation6], %s363
        %s365 = sand.u32 %s63, 1
        %s366 = smul.addr %s365, 8
        %s367 = scalar_lea.vmem [#allocation5], %s366
        %p368 = pneg %p76
        %p369 = pneg %p73
        %p370 = pneg %p97
        %p371 = pneg %p94
        %p372 = pneg %p118
        %p373 = pneg %p115
        %p374 = pneg %p139
        %p375 = pneg %p136
        %p376 = pneg %p160
        %p377 = pneg %p157
        %p378 = pneg %p181
        %p379 = pneg %p178
        %p380 = pneg %p202
        %p381 = pneg %p199
        %p382 = pneg %p228
        %p383 = pneg %p225
        %s384 = sand.u32 %s215, 1
        %s385 = scalar_lea.sflag [#allocation4], %s384
        %s386 = sand.u32 %s215, 1
        %s387 = smul.addr %s386, 16
        %s388 = scalar_lea.vmem [#allocation10], %s387
        %v389 = vld [vmem:[%s334] sm:$0xff]
        %v390 = vunpack.c.l.bf16 %v389
        %v391 = vunpack.c.h.bf16 %v389
        %v392 = vmul.f32 %v390, %v390
        %v393 = vmul.f32 %v391, %v391
        %v394 = vadd.f32 %v392, %v393
        %395 = vadd.xlane.f32.xlu0 %v394
        %v396 = vpop.xlane.xlu0 %395
        %v397 = vmul.f32 %v396, 0.00390625
        %v398 = vadd.f32 %v397, 1e-06
        %v399 = vrsqrt.pop %v398
        %v400 = vmul.f32 %v390, %v399
        %v401 = vmul.f32 %v391, %v399
        %v402 = vld [vmem:[%s2] sm:$0x3]
        %v404 = vlaneseq
        %v405 = vshrl.u32 %v404, 7
        %v406 = vsub.s32 0, %v405
        %v407 = vrot.slane %v402, %v406
        %v408 = vlaneseq
        %v409 = vshrl.u32 %v408, 7
        %v410 = vsub.s32 1, %v409
        %v411 = vrot.slane %v402, %v410
        %v414 = vmul.f32 %v400, %v407
        %v415 = vmul.f32 %v401, %v411
        %v416 = vpack.c.bf16 %v414, %v414
        %v417 = vpack.c.bf16 %v415, %v415
        %v418 = vld [vmem:[#allocation7] sm:$0xff]
        %v419 = vld [vmem:[#allocation7 + $0x8] sm:$0xff]
        %v420 = vld [vmem:[#allocation7 + $0x10] sm:$0xff]
        %v421 = vld [vmem:[#allocation7 + $0x18] sm:$0xff]
        %v422 = vld [vmem:[#allocation7 + $0x20] sm:$0xff]
        %v423 = vld [vmem:[#allocation7 + $0x28] sm:$0xff]
        %v424 = vld [vmem:[#allocation7 + $0x30] sm:$0xff]
        %v425 = vld [vmem:[#allocation7 + $0x38] sm:$0xff]
        %v426 = vld [vmem:[#allocation7 + $0x40] sm:$0xff]
        %v427 = vld [vmem:[#allocation7 + $0x48] sm:$0xff]
        %v428 = vld [vmem:[#allocation7 + $0x50] sm:$0xff]
        %v429 = vld [vmem:[#allocation7 + $0x58] sm:$0xff]
        %v430 = vld [vmem:[#allocation7 + $0x60] sm:$0xff]
        %v431 = vld [vmem:[#allocation7 + $0x68] sm:$0xff]
        %v432 = vld [vmem:[#allocation7 + $0x70] sm:$0xff]
        %v433 = vld [vmem:[#allocation7 + $0x78] sm:$0xff]
        %v434 = vld [vmem:[#allocation7 + $0x80] sm:$0xff]
        %v435 = vld [vmem:[#allocation7 + $0x88] sm:$0xff]
        %v436 = vld [vmem:[#allocation7 + $0x90] sm:$0xff]
        %v437 = vld [vmem:[#allocation7 + $0x98] sm:$0xff]
        %v438 = vld [vmem:[#allocation7 + $0xa0] sm:$0xff]
        %v439 = vld [vmem:[#allocation7 + $0xa8] sm:$0xff]
        %v440 = vld [vmem:[#allocation7 + $0xb0] sm:$0xff]
        %v441 = vld [vmem:[#allocation7 + $0xb8] sm:$0xff]
        %v442 = vld [vmem:[#allocation7 + $0xc0] sm:$0xff]
        %v443 = vld [vmem:[#allocation7 + $0xc8] sm:$0xff]
        %v444 = vld [vmem:[#allocation7 + $0xd0] sm:$0xff]
        %v445 = vld [vmem:[#allocation7 + $0xd8] sm:$0xff]
        %v446 = vld [vmem:[#allocation7 + $0xe0] sm:$0xff]
        %v447 = vld [vmem:[#allocation7 + $0xe8] sm:$0xff]
        %v448 = vld [vmem:[#allocation7 + $0xf0] sm:$0xff]
        %v449 = vld [vmem:[#allocation7 + $0xf8] sm:$0xff]
        %v450 = vld [vmem:[%s4] sm:$0x3]
        %v452 = vlaneseq
        %v453 = vshrl.u32 %v452, 7
        %v454 = vsub.s32 0, %v453
        %v455 = vrot.slane %v450, %v454
        %v456 = vlaneseq
        %v457 = vshrl.u32 %v456, 7
        %v458 = vsub.s32 1, %v457
        %v459 = vrot.slane %v450, %v458
        %v494 = vunpack.c.l.b16 %v418
        %v495 = vunpack.c.h.b16 %v418
        %v496 = vunpack.c.l.b16 %v419
        %v497 = vunpack.c.h.b16 %v419
        %v498 = vunpack.c.l.b16 %v420
        %v499 = vunpack.c.h.b16 %v420
        %v500 = vunpack.c.l.b16 %v421
        %v501 = vunpack.c.h.b16 %v421
        %v502 = vunpack.c.l.b16 %v422
        %v503 = vunpack.c.h.b16 %v422
        %v504 = vunpack.c.l.b16 %v423
        %v505 = vunpack.c.h.b16 %v423
        %v506 = vunpack.c.l.b16 %v424
        %v507 = vunpack.c.h.b16 %v424
        %v508 = vunpack.c.l.b16 %v425
        %v509 = vunpack.c.h.b16 %v425
        %v510 = vunpack.c.l.b16 %v426
        %v511 = vunpack.c.h.b16 %v426
        %v512 = vunpack.c.l.b16 %v427
        %v513 = vunpack.c.h.b16 %v427
        %v514 = vunpack.c.l.b16 %v428
        %v515 = vunpack.c.h.b16 %v428
        %v516 = vunpack.c.l.b16 %v429
        %v517 = vunpack.c.h.b16 %v429
        %v518 = vunpack.c.l.b16 %v430
        %v519 = vunpack.c.h.b16 %v430
        %v520 = vunpack.c.l.b16 %v431
        %v521 = vunpack.c.h.b16 %v431
        %v522 = vunpack.c.l.b16 %v432
        %v523 = vunpack.c.h.b16 %v432
        %v524 = vunpack.c.l.b16 %v433
        %v525 = vunpack.c.h.b16 %v433
        %v526 = vunpack.c.l.b16 %v434
        %v527 = vunpack.c.h.b16 %v434
        %v528 = vunpack.c.l.b16 %v435
        %v529 = vunpack.c.h.b16 %v435
        %v530 = vunpack.c.l.b16 %v436
        %v531 = vunpack.c.h.b16 %v436
        %v532 = vunpack.c.l.b16 %v437
        %v533 = vunpack.c.h.b16 %v437
        %v534 = vunpack.c.l.b16 %v438
        %v535 = vunpack.c.h.b16 %v438
        %v536 = vunpack.c.l.b16 %v439
        %v537 = vunpack.c.h.b16 %v439
        %v538 = vunpack.c.l.b16 %v440
        %v539 = vunpack.c.h.b16 %v440
        %v540 = vunpack.c.l.b16 %v441
        %v541 = vunpack.c.h.b16 %v441
        %v542 = vunpack.c.l.b16 %v442
        %v543 = vunpack.c.h.b16 %v442
        %v544 = vunpack.c.l.b16 %v443
        %v545 = vunpack.c.h.b16 %v443
        %v546 = vunpack.c.l.b16 %v444
        %v547 = vunpack.c.h.b16 %v444
        %v548 = vunpack.c.l.b16 %v445
        %v549 = vunpack.c.h.b16 %v445
        %v550 = vunpack.c.l.b16 %v446
        %v551 = vunpack.c.h.b16 %v446
        %v552 = vunpack.c.l.b16 %v447
        %v553 = vunpack.c.h.b16 %v447
        %v554 = vunpack.c.l.b16 %v448
        %v555 = vunpack.c.h.b16 %v448
        %v556 = vunpack.c.l.b16 %v449
        %v557 = vunpack.c.h.b16 %v449
        %v558 = vpack.c.b16 %v496, %v494
        %v559 = vpack.c.b16 %v497, %v495
        %v560 = vpack.c.b16 %v500, %v498
        %v561 = vpack.c.b16 %v501, %v499
        %v562 = vpack.c.b16 %v504, %v502
        %v563 = vpack.c.b16 %v505, %v503
        %v564 = vpack.c.b16 %v508, %v506
        %v565 = vpack.c.b16 %v509, %v507
        %v566 = vpack.c.b16 %v512, %v510
        %v567 = vpack.c.b16 %v513, %v511
        %v568 = vpack.c.b16 %v516, %v514
        %v569 = vpack.c.b16 %v517, %v515
        %v570 = vpack.c.b16 %v520, %v518
        %v571 = vpack.c.b16 %v521, %v519
        %v572 = vpack.c.b16 %v524, %v522
        %v573 = vpack.c.b16 %v525, %v523
        %v574 = vpack.c.b16 %v528, %v526
        %v575 = vpack.c.b16 %v529, %v527
        %v576 = vpack.c.b16 %v532, %v530
        %v577 = vpack.c.b16 %v533, %v531
        %v578 = vpack.c.b16 %v536, %v534
        %v579 = vpack.c.b16 %v537, %v535
        %v580 = vpack.c.b16 %v540, %v538
        %v581 = vpack.c.b16 %v541, %v539
        %v582 = vpack.c.b16 %v544, %v542
        %v583 = vpack.c.b16 %v545, %v543
        %v584 = vpack.c.b16 %v548, %v546
        %v585 = vpack.c.b16 %v549, %v547
        %v586 = vpack.c.b16 %v552, %v550
        %v587 = vpack.c.b16 %v553, %v551
        %v588 = vpack.c.b16 %v556, %v554
        %v589 = vpack.c.b16 %v557, %v555
        %622 = vmatprep.subr.bf16.mxu0 %v573
        %623 = vmatpush1.bf16.msra.mxu0 %v572
        %624 = vmatprep.subr.bf16.mxu0 %v571
        %625 = vmatpush1.bf16.msra.mxu0 %v570
        %626 = vmatprep.subr.bf16.mxu0 %v569
        %627 = vmatpush1.bf16.msra.mxu0 %v568
        %628 = vmatprep.subr.bf16.mxu0 %v567
        %629 = vmatpush1.bf16.msra.mxu0 %v566
        %630 = vmatprep.subr.bf16.mxu0 %v565
        %631 = vmatpush1.bf16.msra.mxu0 %v564
        %632 = vmatprep.subr.bf16.mxu0 %v563
        %633 = vmatpush1.bf16.msra.mxu0 %v562
        %634 = vmatprep.subr.bf16.mxu0 %v561
        %635 = vmatpush1.bf16.msra.mxu0 %v560
        %636 = vmatprep.subr.bf16.mxu0 %v559
        %637 = vmatpush1.bf16.msra.mxu0 %v558
        %638 = vmatprep.subr.bf16.mxu0 %v589
        %639 = vmatpush2.bf16.msra.mxu0 %v588
        %640 = vmatprep.subr.bf16.mxu0 %v587
        %641 = vmatpush2.bf16.msra.mxu0 %v586
        %642 = vmatprep.subr.bf16.mxu0 %v585
        %643 = vmatpush2.bf16.msra.mxu0 %v584
        %644 = vmatprep.subr.bf16.mxu0 %v583
        %645 = vmatpush2.bf16.msra.mxu0 %v582
        %646 = vmatprep.subr.bf16.mxu0 %v581
        %647 = vmatpush2.bf16.msra.mxu0 %v580
        %648 = vmatprep.subr.bf16.mxu0 %v579
        %649 = vmatpush2.bf16.msra.mxu0 %v578
        %650 = vmatprep.subr.bf16.mxu0 %v577
        %651 = vmatpush2.bf16.msra.mxu0 %v576
        %652 = vmatprep.subr.bf16.mxu0 %v575
        %653 = vmatpush2.bf16.msra.mxu0 %v574
        %654 = vmatprep.mubr.bf16.mxu0 %v417
        %655 = vmatmul.mubr.bf16.gmra.mxu0 %v416
        %v656 = vpop.f32.mrf.mxu0
        %v657 = vadd.f32 %v455, %v656
        %v658 = vpop.f32.mrf.mxu0
        %v659 = vadd.f32 %v459, %v658
        %v660 = vpop.f32.mrf.mxu0
        %v661 = vpop.f32.mrf.mxu0
        %662 = vdwg.mxu0
        %vm663 = vcmp.gt.f32.partialorder %v657, 0.0
        %vm664 = vcmp.gt.f32.partialorder %v659, 0.0
        %v665 = vmin.f32 %v657, 0.0
        %v666 = vmin.f32 %v659, 0.0
        %v667 = vmul.f32 %v665, 1.442695
        %v668 = vpow.pop %v667
        %v669 = vmul.f32 %v666, 1.442695
        %v670 = vpow.pop %v669
        %v671 = vsub.f32 %v668, 1.0
        %v672 = vsub.f32 %v670, 1.0
        %v673 = vsel %vm663, %v657, %v671
        %v674 = vsel %vm664, %v659, %v672
        %v675 = vld [vmem:[%s343] sm:$0xff]
        %v676 = vunpack.c.l.bf16 %v675
        %v677 = vunpack.c.h.bf16 %v675
        %v678 = vmul.f32 %v676, %v676
        %v679 = vmul.f32 %v677, %v677
        %v680 = vadd.f32 %v678, %v679
        %681 = vadd.xlane.f32.xlu0 %v680
        %v682 = vpop.xlane.xlu0 %681
        %v683 = vmul.f32 %v682, 0.00390625
        %v684 = vadd.f32 %v683, 1e-06
        %v685 = vrsqrt.pop %v684
        %v686 = vmul.f32 %v676, %v685
        %v687 = vmul.f32 %v677, %v685
        %v688 = vld [vmem:[%s5] sm:$0x3]
        %v690 = vlaneseq
        %v691 = vshrl.u32 %v690, 7
        %v692 = vsub.s32 0, %v691
        %v693 = vrot.slane %v688, %v692
        %v694 = vlaneseq
        %v695 = vshrl.u32 %v694, 7
        %v696 = vsub.s32 1, %v695
        %v697 = vrot.slane %v688, %v696
        %v700 = vmul.f32 %v686, %v693
        %v701 = vmul.f32 %v687, %v697
        %v702 = vpack.c.bf16 %v700, %v700
        %v703 = vpack.c.bf16 %v701, %v701
        %v704 = vld [vmem:[#allocation8] sm:$0xff]
        %v705 = vld [vmem:[#allocation8 + $0x8] sm:$0xff]
        %v706 = vld [vmem:[#allocation8 + $0x10] sm:$0xff]
        %v707 = vld [vmem:[#allocation8 + $0x18] sm:$0xff]
        %v708 = vld [vmem:[#allocation8 + $0x20] sm:$0xff]
        %v709 = vld [vmem:[#allocation8 + $0x28] sm:$0xff]
        %v710 = vld [vmem:[#allocation8 + $0x30] sm:$0xff]
        %v711 = vld [vmem:[#allocation8 + $0x38] sm:$0xff]
        %v712 = vld [vmem:[#allocation8 + $0x40] sm:$0xff]
        %v713 = vld [vmem:[#allocation8 + $0x48] sm:$0xff]
        %v714 = vld [vmem:[#allocation8 + $0x50] sm:$0xff]
        %v715 = vld [vmem:[#allocation8 + $0x58] sm:$0xff]
        %v716 = vld [vmem:[#allocation8 + $0x60] sm:$0xff]
        %v717 = vld [vmem:[#allocation8 + $0x68] sm:$0xff]
        %v718 = vld [vmem:[#allocation8 + $0x70] sm:$0xff]
        %v719 = vld [vmem:[#allocation8 + $0x78] sm:$0xff]
        %v720 = vld [vmem:[#allocation8 + $0x80] sm:$0xff]
        %v721 = vld [vmem:[#allocation8 + $0x88] sm:$0xff]
        %v722 = vld [vmem:[#allocation8 + $0x90] sm:$0xff]
        %v723 = vld [vmem:[#allocation8 + $0x98] sm:$0xff]
        %v724 = vld [vmem:[#allocation8 + $0xa0] sm:$0xff]
        %v725 = vld [vmem:[#allocation8 + $0xa8] sm:$0xff]
        %v726 = vld [vmem:[#allocation8 + $0xb0] sm:$0xff]
        %v727 = vld [vmem:[#allocation8 + $0xb8] sm:$0xff]
        %v728 = vld [vmem:[#allocation8 + $0xc0] sm:$0xff]
        %v729 = vld [vmem:[#allocation8 + $0xc8] sm:$0xff]
        %v730 = vld [vmem:[#allocation8 + $0xd0] sm:$0xff]
        %v731 = vld [vmem:[#allocation8 + $0xd8] sm:$0xff]
        %v732 = vld [vmem:[#allocation8 + $0xe0] sm:$0xff]
        %v733 = vld [vmem:[#allocation8 + $0xe8] sm:$0xff]
        %v734 = vld [vmem:[#allocation8 + $0xf0] sm:$0xff]
        %v735 = vld [vmem:[#allocation8 + $0xf8] sm:$0xff]
        %v736 = vld [vmem:[%s7] sm:$0x3]
        %v738 = vlaneseq
        %v739 = vshrl.u32 %v738, 7
        %v740 = vsub.s32 0, %v739
        %v741 = vrot.slane %v736, %v740
        %v742 = vlaneseq
        %v743 = vshrl.u32 %v742, 7
        %v744 = vsub.s32 1, %v743
        %v745 = vrot.slane %v736, %v744
        %v780 = vunpack.c.l.b16 %v704
        %v781 = vunpack.c.h.b16 %v704
        %v782 = vunpack.c.l.b16 %v705
        %v783 = vunpack.c.h.b16 %v705
        %v784 = vunpack.c.l.b16 %v706
        %v785 = vunpack.c.h.b16 %v706
        %v786 = vunpack.c.l.b16 %v707
        %v787 = vunpack.c.h.b16 %v707
        %v788 = vunpack.c.l.b16 %v708
        %v789 = vunpack.c.h.b16 %v708
        %v790 = vunpack.c.l.b16 %v709
        %v791 = vunpack.c.h.b16 %v709
        %v792 = vunpack.c.l.b16 %v710
        %v793 = vunpack.c.h.b16 %v710
        %v794 = vunpack.c.l.b16 %v711
        %v795 = vunpack.c.h.b16 %v711
        %v796 = vunpack.c.l.b16 %v712
        %v797 = vunpack.c.h.b16 %v712
        %v798 = vunpack.c.l.b16 %v713
        %v799 = vunpack.c.h.b16 %v713
        %v800 = vunpack.c.l.b16 %v714
        %v801 = vunpack.c.h.b16 %v714
        %v802 = vunpack.c.l.b16 %v715
        %v803 = vunpack.c.h.b16 %v715
        %v804 = vunpack.c.l.b16 %v716
        %v805 = vunpack.c.h.b16 %v716
        %v806 = vunpack.c.l.b16 %v717
        %v807 = vunpack.c.h.b16 %v717
        %v808 = vunpack.c.l.b16 %v718
        %v809 = vunpack.c.h.b16 %v718
        %v810 = vunpack.c.l.b16 %v719
        %v811 = vunpack.c.h.b16 %v719
        %v812 = vunpack.c.l.b16 %v720
        %v813 = vunpack.c.h.b16 %v720
        %v814 = vunpack.c.l.b16 %v721
        %v815 = vunpack.c.h.b16 %v721
        %v816 = vunpack.c.l.b16 %v722
        %v817 = vunpack.c.h.b16 %v722
        %v818 = vunpack.c.l.b16 %v723
        %v819 = vunpack.c.h.b16 %v723
        %v820 = vunpack.c.l.b16 %v724
        %v821 = vunpack.c.h.b16 %v724
        %v822 = vunpack.c.l.b16 %v725
        %v823 = vunpack.c.h.b16 %v725
        %v824 = vunpack.c.l.b16 %v726
        %v825 = vunpack.c.h.b16 %v726
        %v826 = vunpack.c.l.b16 %v727
        %v827 = vunpack.c.h.b16 %v727
        %v828 = vunpack.c.l.b16 %v728
        %v829 = vunpack.c.h.b16 %v728
        %v830 = vunpack.c.l.b16 %v729
        %v831 = vunpack.c.h.b16 %v729
        %v832 = vunpack.c.l.b16 %v730
        %v833 = vunpack.c.h.b16 %v730
        %v834 = vunpack.c.l.b16 %v731
        %v835 = vunpack.c.h.b16 %v731
        %v836 = vunpack.c.l.b16 %v732
        %v837 = vunpack.c.h.b16 %v732
        %v838 = vunpack.c.l.b16 %v733
        %v839 = vunpack.c.h.b16 %v733
        %v840 = vunpack.c.l.b16 %v734
        %v841 = vunpack.c.h.b16 %v734
        %v842 = vunpack.c.l.b16 %v735
        %v843 = vunpack.c.h.b16 %v735
        %v844 = vpack.c.b16 %v782, %v780
        %v845 = vpack.c.b16 %v783, %v781
        %v846 = vpack.c.b16 %v786, %v784
        %v847 = vpack.c.b16 %v787, %v785
        %v848 = vpack.c.b16 %v790, %v788
        %v849 = vpack.c.b16 %v791, %v789
        %v850 = vpack.c.b16 %v794, %v792
        %v851 = vpack.c.b16 %v795, %v793
        %v852 = vpack.c.b16 %v798, %v796
        %v853 = vpack.c.b16 %v799, %v797
        %v854 = vpack.c.b16 %v802, %v800
        %v855 = vpack.c.b16 %v803, %v801
        %v856 = vpack.c.b16 %v806, %v804
        %v857 = vpack.c.b16 %v807, %v805
        %v858 = vpack.c.b16 %v810, %v808
        %v859 = vpack.c.b16 %v811, %v809
        %v860 = vpack.c.b16 %v814, %v812
        %v861 = vpack.c.b16 %v815, %v813
        %v862 = vpack.c.b16 %v818, %v816
        %v863 = vpack.c.b16 %v819, %v817
        %v864 = vpack.c.b16 %v822, %v820
        %v865 = vpack.c.b16 %v823, %v821
        %v866 = vpack.c.b16 %v826, %v824
        %v867 = vpack.c.b16 %v827, %v825
        %v868 = vpack.c.b16 %v830, %v828
        %v869 = vpack.c.b16 %v831, %v829
        %v870 = vpack.c.b16 %v834, %v832
        %v871 = vpack.c.b16 %v835, %v833
        %v872 = vpack.c.b16 %v838, %v836
        %v873 = vpack.c.b16 %v839, %v837
        %v874 = vpack.c.b16 %v842, %v840
        %v875 = vpack.c.b16 %v843, %v841
        %908 = vmatprep.subr.bf16.mxu0 %v859
        %909 = vmatpush1.bf16.msra.mxu0 %v858
        %910 = vmatprep.subr.bf16.mxu0 %v857
        %911 = vmatpush1.bf16.msra.mxu0 %v856
        %912 = vmatprep.subr.bf16.mxu0 %v855
        %913 = vmatpush1.bf16.msra.mxu0 %v854
        %914 = vmatprep.subr.bf16.mxu0 %v853
        %915 = vmatpush1.bf16.msra.mxu0 %v852
        %916 = vmatprep.subr.bf16.mxu0 %v851
        %917 = vmatpush1.bf16.msra.mxu0 %v850
        %918 = vmatprep.subr.bf16.mxu0 %v849
        %919 = vmatpush1.bf16.msra.mxu0 %v848
        %920 = vmatprep.subr.bf16.mxu0 %v847
        %921 = vmatpush1.bf16.msra.mxu0 %v846
        %922 = vmatprep.subr.bf16.mxu0 %v845
        %923 = vmatpush1.bf16.msra.mxu0 %v844
        %924 = vmatprep.subr.bf16.mxu0 %v875
        %925 = vmatpush2.bf16.msra.mxu0 %v874
        %926 = vmatprep.subr.bf16.mxu0 %v873
        %927 = vmatpush2.bf16.msra.mxu0 %v872
        %928 = vmatprep.subr.bf16.mxu0 %v871
        %929 = vmatpush2.bf16.msra.mxu0 %v870
        %930 = vmatprep.subr.bf16.mxu0 %v869
        %931 = vmatpush2.bf16.msra.mxu0 %v868
        %932 = vmatprep.subr.bf16.mxu0 %v867
        %933 = vmatpush2.bf16.msra.mxu0 %v866
        %934 = vmatprep.subr.bf16.mxu0 %v865
        %935 = vmatpush2.bf16.msra.mxu0 %v864
        %936 = vmatprep.subr.bf16.mxu0 %v863
        %937 = vmatpush2.bf16.msra.mxu0 %v862
        %938 = vmatprep.subr.bf16.mxu0 %v861
        %939 = vmatpush2.bf16.msra.mxu0 %v860
        %940 = vmatprep.mubr.bf16.mxu0 %v703
        %941 = vmatmul.mubr.bf16.gmra.mxu0 %v702
        %v942 = vpop.f32.mrf.mxu0
        %v943 = vadd.f32 %v741, %v942
        %v944 = vpop.f32.mrf.mxu0
        %v945 = vadd.f32 %v745, %v944
        %v946 = vpop.f32.mrf.mxu0
        %v947 = vpop.f32.mrf.mxu0
        %948 = vdwg.mxu0
        %vm949 = vcmp.gt.f32.partialorder %v943, 0.0
        %vm950 = vcmp.gt.f32.partialorder %v945, 0.0
        %v951 = vmin.f32 %v943, 0.0
        %v952 = vmin.f32 %v945, 0.0
        %v953 = vmul.f32 %v951, 1.442695
        %v954 = vpow.pop %v953
        %v955 = vmul.f32 %v952, 1.442695
        %v956 = vpow.pop %v955
        %v957 = vsub.f32 %v954, 1.0
        %v958 = vsub.f32 %v956, 1.0
        %v959 = vsel %vm949, %v943, %v957
        %v960 = vsel %vm950, %v945, %v958
        %v961 = vrot.slane %v959, 4
        %v962 = vadd.f32 %v959, %v961
        %v963 = vrot.slane %v962, 2
        %v964 = vadd.f32 %v962, %v963
        %v965 = vrot.slane %v964, 1
        %v966 = vadd.f32 %v964, %v965
        %v967 = vrot.slane %v960, 4
        %v968 = vadd.f32 %v960, %v967
        %v969 = vrot.slane %v968, 2
        %v970 = vadd.f32 %v968, %v969
        %v971 = vrot.slane %v970, 1
        %v972 = vadd.f32 %v970, %v971
        %vm973 = vcmp.gt.f32.partialorder %v736, 0.0
        %v974 = vmin.f32 %v736, 0.0
        %v975 = vmul.f32 %v974, 1.442695
        %v976 = vpow.pop %v975
        %v977 = vsub.f32 %v976, 1.0
        %v978 = vsel %vm973, %v736, %v977
        %v979 = vmul.f32 %v978, 2.0
        %v981 = vlaneseq
        %v982 = vshrl.u32 %v981, 7
        %v983 = vsub.s32 0, %v982
        %v984 = vrot.slane %v979, %v983
        %v985 = vlaneseq
        %v986 = vshrl.u32 %v985, 7
        %v987 = vsub.s32 1, %v986
        %v988 = vrot.slane %v979, %v987
        %v991 = vsub.f32 %v966, %v984
        %v992 = vsub.f32 %v972, %v988
        %v993 = vmul.f32 %v991, 0.16666667
        %v994 = vmul.f32 %v992, 0.16666667
        %v995 = vlaneseq
        %v996 = vshrl.u32 %v995, 7
        %v997 = vsub.s32 0, %v996
        %v998 = vrot.slane %v993, %v997
        %v999 = vlaneseq
        %v1000 = vshrl.u32 %v999, 7
        %v1001 = vsub.s32 0, %v1000
        %v1002 = vrot.slane %v994, %v1001
        %v1003 = vadd.f32 %v673, %v998
        %v1004 = vadd.f32 %v674, %v1002
        %1005 = vst [vmem:[%s388] sm:$0xff] %v1003
        %1006 = vst [vmem:[%s388 + $0x8] sm:$0xff] %v1004
        %s1007 = sand.u32 %s215, 1
        %s1008 = scalar_lea.sflag [#allocation4], %s1007
        %s1009 = sand.u32 %s215, 1
        %s1010 = smul.addr %s1009, 16
        %s1011 = scalar_lea.vmem [#allocation10], %s1010
        // Predicated region
        $region69: #{tpu_custom_call.1} parent=51 // pred_check
          %p1012 = pneg %p225
        $region70: #{tpu_custom_call.1} parent=51 // pred_check_branch
          %1014 = sbr.rel (%p1012) target = $region72
        $region71: #{tpu_custom_call.1} parent=51 // pred_region
          %s1016 = ssub.s32 256, 256
          %1017 = vsyncadd %s1008, %s1016
          %s1018 = smul.addr %s29, 2
          %s1019 = smul.addr %s1018, 128
          %s1020 = scalar_lea.hbm %s8, %s1019
          %s1022 = sshll.u32 %s1011, 4
          %s1023 = int_to_ptr.vmem [resolvable:$true] %s1022
          %1025 = dma.vmem_to_hbm [thread:$0]  %s1023, 256, %s1020, %s1008
        $region72: #{tpu_custom_call.1} parent=51 // pred_fallthru
          _
      $region52: #{tpu_custom_call.1} parent=5 // pred_fallthru
        _
      %p1026 = scmp.le.s32.totalorder 2, %s24
      // Predicated region
      $region73: #{tpu_custom_call.1} parent=5 // pred_check
        %p1027 = pneg %p1026
      $region74: #{tpu_custom_call.1} parent=5 // pred_check_branch
        %1029 = sbr.rel (%p1027) target = $region76
      $region75: #{tpu_custom_call.1} parent=5 // pred_region
        %s1030 = ssub.s32 %s24, 2
        // Predicated region
        $region77: #{tpu_custom_call.1} parent=75 // pred_check
          %p1031 = pneg %p231
        $region78: #{tpu_custom_call.1} parent=75 // pred_check_branch
          %1033 = sbr.rel (%p1031) target = $region80
        $region79: #{tpu_custom_call.1} parent=75 // pred_region
          %s1034 = sand.u32 %s216, 1
          %s1035 = scalar_lea.sflag [#allocation4], %s1034
          %s1036 = sand.u32 %s216, 1
          %s1037 = smul.addr %s1036, 16
          %s1038 = scalar_lea.vmem [#allocation10], %s1037
          %1039 = dma.done %s1035, 256
        $region80: #{tpu_custom_call.1} parent=75 // pred_fallthru
          _
      $region76: #{tpu_custom_call.1} parent=5 // pred_fallthru
        _
    $region6: #{tpu_custom_call.1} parent=1 // loop_footer
      %s28 = sadd.s32 1, %s24
    $region7: #{tpu_custom_call.1} parent=1 // loop_footer_branch
      %23 = sbr.rel target = $region3
    $region8: #{tpu_custom_call.1} parent=1 // loop_exit
      _
    %1040 = vsyncpa [#allocation3], 1
    %s1041 = scalar_lea.sflag [#allocation3], 1
    %1042 = vsyncpa %s1041, 1
    %1043 = vsyncpa [#allocation6], 1
    %s1044 = scalar_lea.sflag [#allocation6], 1
    %1045 = vsyncpa %s1044, 1
    %1046 = vsyncpa [#allocation9], 1
    %1047 = vsyncpa [#allocation4], 1
    %s1048 = scalar_lea.sflag [#allocation4], 1
    %1049 = vsyncpa %s1048, 1

</llo_original>
